<compile_context>
chip_gen: v6e
topology: v6e:2x2x1
jax: 0.10.0
libtpu: 0.0.40
codegen_flags: <defaults>
</compile_context>

<pallas_src>
import functools

import jax
import jax.numpy as jnp
from jax.experimental import pallas as pl
from jax.experimental.pallas import tpu as pltpu

_LANES = 128                      # vreg lane width: lane-dense, unmasked vst
_SUBLANES = 32                    # row-tile granularity; covers all dtype packings
_BLOCK_BYTES = 8 * 1024 * 1024    # per-block byte cap (amortizes per-step overhead)
_VMEM_LIMIT = 48 * 1024 * 1024    # 4 double-buffers x 8 MiB = 32 MiB + headroom
_MIN_KERNEL_ELEMS = 1024          # below one vreg, kernel setup cost dominates


def identity(x: jax.Array) -> jax.Array:
    """True Identity forward pass: the optimal implementation is no kernel at all."""
    return x


def _identity_copy_kernel(x_ref, o_ref):
    # Pure pass-through: copy the current VMEM tile of the input to the output.
    o_ref[...] = x_ref[...]


def _plan_block_rows(rows: int, cols: int, itemsize: int) -> int:
    """Pick the per-step row tile.

    As large as the byte cap allows (fewest grid steps => HBM-roofline copy),
    rounded to a multiple of 32 sublanes, and split into >=2 blocks whenever
    possible so v7x's two TensorCores both participate.
    """
    max_rows = (_BLOCK_BYTES // (cols * itemsize)) // _SUBLANES * _SUBLANES
    max_rows = max(_SUBLANES, max_rows)
    block_rows = min(rows, max_rows)
    if rows >= 2 * _SUBLANES:
        # Aim for at least two grid steps (v7x dual-TC; harmless elsewhere).
        half = -(-rows // 2)
        half = -(-half // _SUBLANES) * _SUBLANES
        block_rows = min(block_rows, half)
    if block_rows < rows:
        block_rows = max(_SUBLANES, (block_rows // _SUBLANES) * _SUBLANES)
    return block_rows


def _identity_copy_call(x2d: jax.Array, *, alias: bool) -> jax.Array:
    rows, cols = x2d.shape
    itemsize = jnp.dtype(x2d.dtype).itemsize
    block_rows = _plan_block_rows(rows, cols, itemsize)
    grid_rows = pl.cdiv(rows, block_rows)
    return pl.pallas_call(
        _identity_copy_kernel,
        out_shape=jax.ShapeDtypeStruct((rows, cols), x2d.dtype),
        grid_spec=pl.GridSpec(
            grid=(grid_rows,),
            in_specs=[pl.BlockSpec((block_rows, cols), lambda i: (i, 0))],
            out_specs=pl.BlockSpec((block_rows, cols), lambda i: (i, 0)),
        ),
        # Only meaningful when the caller actually donates the buffer.
        input_output_aliases=({0: 0} if alias else {}),
        compiler_params=pltpu.CompilerParams(
            dimension_semantics=("parallel",),
            vmem_limit_bytes=_VMEM_LIMIT,
        ),
    )(x2d)


def _identity_pallas_impl(x: jax.Array, *, alias: bool) -> jax.Array:
    orig_shape = x.shape

    # Sub-vreg payloads: fixed kernel/DMA setup cost dominates — just return.
    if x.size == 0 or x.size < _MIN_KERNEL_ELEMS:
        return x

    total = x.size
    flat = x.reshape(-1)

    # Always take the lane-dense path: pad to a multiple of 128 so stores are
    # full-width vst and tiling never blows VMEM on odd-sized 1-D inputs.
    padded = ((total + _LANES - 1) // _LANES) * _LANES
    if padded != total:
        flat = jnp.pad(flat, (0, padded - total))
    x2d = flat.reshape(padded // _LANES, _LANES)

    out2d = _identity_copy_call(x2d, alias=alias)

    out = out2d.reshape(-1)
    if padded != total:
        out = out[:total]
    return out.reshape(orig_shape)


def identity_pallas(x: jax.Array) -> jax.Array:
    """Kernel-backed identity copy. The caller's input remains valid (no alias)."""
    return _identity_pallas_impl(x, alias=False)


@functools.partial(jax.jit, donate_argnums=0)
def identity_pallas_donated(x: jax.Array) -> jax.Array:
    """Kernel-backed identity that donates/aliases the input HBM buffer.

    NOTE: the argument buffer is invalidated after the call (donate_argnums=0),
    which is what makes the pallas-level input_output_aliases={0: 0} real.
    """
    return _identity_pallas_impl(x, alias=True)


if __name__ == "__main__":
    key = jax.random.PRNGKey(0)
    # NCHW input, small shape: batch=2, channels=4, spatial=16x16 (2048 elems).
    shape = (2, 4, 16, 16)
    x = jax.random.normal(key, shape, dtype=jnp.float32)

    # 1) True forward-pass semantics: zero-cost pass-through.
    y0 = identity(x)
    assert y0 is x, "identity() must return its input unchanged"

    # 2) Kernel-backed copy (safe default: input stays valid).
    y1 = jax.block_until_ready(identity_pallas(x))
    assert y1.shape == x.shape, f"shape mismatch: {y1.shape} vs {x.shape}"
    assert y1.dtype == x.dtype, f"dtype mismatch: {y1.dtype} vs {x.dtype}"
    assert bool(jnp.array_equal(y1, x)), "identity_pallas output differs from input"

    # 3) Donating variant: pass a fresh copy because its buffer is consumed.
    x_copy = jnp.array(x, copy=True)
    y2 = jax.block_until_ready(identity_pallas_donated(x_copy))
    assert y2.shape == x.shape and y2.dtype == x.dtype
    assert bool(jnp.array_equal(y2, x)), "donated identity output differs from input"

    print("KERNEL_OK")
</pallas_src>

<mosaic_0001>
module attributes {stable_mosaic.version = 11 : i64} {
  func.func @_identity_copy_kernel(%arg0: i32, %arg1: memref<16x128xf32, #tpu.memory_space<vmem>>, %arg2: memref<16x128xf32, #tpu.memory_space<vmem>>) attributes {dimension_semantics = [#tpu.dimension_semantics<parallel>], iteration_bounds = array<i64: 1>, scalar_prefetch = 0 : i64, scratch_operands = 0 : i64, tpu.core_type = #tpu.core_type<tc>, window_params = [{transform_indices = @transform_0, window_bounds = array<i64: 16, 128>}, {transform_indices = @transform_1, window_bounds = array<i64: 16, 128>}]} {
    %c0 = arith.constant 0 : index
    %c0_0 = arith.constant 0 : index
    %0 = vector.load %arg1[%c0, %c0_0] : memref<16x128xf32, #tpu.memory_space<vmem>>, vector<16x128xf32>
    %c0_1 = arith.constant 0 : index
    %c0_2 = arith.constant 0 : index
    %1 = vector.load %arg2[%c0_1, %c0_2] : memref<16x128xf32, #tpu.memory_space<vmem>>, vector<16x128xf32>
    tpu.vector_store %arg2[%c0_1, %c0_2], %0 {strides = array<i32>} : memref<16x128xf32, #tpu.memory_space<vmem>>, vector<16x128xf32>,
    return
  }
  func.func @transform_0(%arg0: i32) -> (i32, i32) {
    %c0_i32 = arith.constant 0 : i32
    %c0_i32_0 = arith.constant 0 : i32
    return %arg0, %c0_i32 : i32, i32
  }
  func.func @transform_1(%arg0: i32) -> (i32, i32) {
    %c0_i32 = arith.constant 0 : i32
    %c0_i32_0 = arith.constant 0 : i32
    return %arg0, %c0_i32 : i32, i32
  }
}

</mosaic_0001>

<llo_original>
// kernel: tpu_custom_call.1
$region0: #{tpu_custom_call.1}
  #allocation0 [shape = 'u32[]', space=smem, size = 0x4, offset = 0x4, fixed_abs, tag = 'smem constant byte address 0x4 - core index']
  #allocation1 [shape = 'u32[144,128]{1,0:T(1,128)}', space=vmem, size = 0x12000, scoped, tag = 'internal scratch']
  %s0 = inlined_call_operand.hbm [shape: f32[16,128], index: 0, kind: input, shape index: {}]
  %s1 = inlined_call_operand.hbm [shape: f32[16,128], index: 1, kind: output, shape index: {}]
  %s2 = sld [smem:[#allocation0]]
  $region18: #{tpu_custom_call.1} parent=0
    _
  %s4 = ssub.s32 1, %s2
  %s5 = scalar_select 0, %s4, %s2
  $region1: #{tpu_custom_call.1} parent=0
    #allocation2 [shape = 'u8[8192]{0}', space=vmem, size = 0x2000, scoped, tag = 'input window, operand 0, single buffered']
    #allocation3 [shape = 's32[1]{0}', space=sflag, size = 0x4, scoped, tag = 'scoped memory for tpu_custom_call.1']
    #allocation4 [shape = 's32[1]{0}', space=sflag, size = 0x4, scoped, tag = 'scoped memory for tpu_custom_call.1']
    #allocation5 [shape = 'u8[8192]{0}', space=vmem, size = 0x2000, scoped, tag = 'output window, operand 0, single buffered']
    %6 = vsyncpa [#allocation3], 0
    %7 = vsyncpa [#allocation4], 0
    // Predicated region
    $region2: #{tpu_custom_call.1} parent=1 // pred_check
      _
    $region3: #{tpu_custom_call.1} parent=1 // pred_check_branch
      %9 = sbr.rel (0) target = $region5
    $region4: #{tpu_custom_call.1} parent=1 // pred_region
      %s11 = ssub.s32 256, 256
      %12 = vsyncadd [#allocation3], %s11
      %s13 = sshll.u32 [#allocation2], 4
      %s14 = int_to_ptr.vmem [resolvable:$true] %s13
      %19 = dma.hbm_to_vmem [thread:$0]  %s0, 256, %s14, [#allocation3], 128, 128, 8
    $region5: #{tpu_custom_call.1} parent=1 // pred_fallthru
      _
    // Predicated region
    $region6: #{tpu_custom_call.1} parent=1 // pred_check
      _
    $region7: #{tpu_custom_call.1} parent=1 // pred_check_branch
      %21 = sbr.rel (0) target = $region9
    $region8: #{tpu_custom_call.1} parent=1 // pred_region
      %22 = dma.done [#allocation3], 256
    $region9: #{tpu_custom_call.1} parent=1 // pred_fallthru
      _
    %v23 = vld [vmem:[#allocation2] sm:$0xff]
    %v24 = vld [vmem:[#allocation2 + $0x8] sm:$0xff]
    %25 = vst [vmem:[#allocation5] sm:$0xff] %v23
    %26 = vst [vmem:[#allocation5 + $0x8] sm:$0xff] %v24
    // Predicated region
    $region10: #{tpu_custom_call.1} parent=1 // pred_check
      _
    $region11: #{tpu_custom_call.1} parent=1 // pred_check_branch
      %28 = sbr.rel (0) target = $region13
    $region12: #{tpu_custom_call.1} parent=1 // pred_region
      %s30 = ssub.s32 256, 256
      %31 = vsyncadd [#allocation4], %s30
      %s32 = sshll.u32 [#allocation5], 4
      %s33 = int_to_ptr.vmem [resolvable:$true] %s32
      %38 = dma.vmem_to_hbm [thread:$0]  %s33, 256, %s1, [#allocation4], 128, 128, 8
    $region13: #{tpu_custom_call.1} parent=1 // pred_fallthru
      _
    // Predicated region
    $region14: #{tpu_custom_call.1} parent=1 // pred_check
      _
    $region15: #{tpu_custom_call.1} parent=1 // pred_check_branch
      %40 = sbr.rel (0) target = $region17
    $region16: #{tpu_custom_call.1} parent=1 // pred_region
      %41 = dma.done [#allocation4], 256
    $region17: #{tpu_custom_call.1} parent=1 // pred_fallthru
      _
    %42 = vsyncpa [#allocation3], 1
    %43 = vsyncpa [#allocation4], 1

</llo_original>
